<compile_context>
chip_gen: v6e
topology: v6e:2x2x1
jax: 0.10.0
libtpu: 0.0.40
codegen_flags: <defaults>
</compile_context>

<pallas_src>
import functools

import jax
import jax.numpy as jnp
import numpy as np
from jax.experimental import pallas as pl
from jax.experimental.pallas import tpu as pltpu


def _round_up(x: int, m: int) -> int:
    return ((x + m - 1) // m) * m


def _cdiv(a: int, b: int) -> int:
    return (a + b - 1) // b


@functools.lru_cache(maxsize=None)
def _spectral_pool_matrix_np(l_in: int, outputlength: int, norm: str,
                             l_pad: int, n_pad: int):
    """Host-side construction of the zero-padded pooling matrix T.

    Returns (T_pad, l_out) with T_pad of shape (l_pad, n_pad); the top-left
    (l_in, l_out) block satisfies x @ T == irfft(rfft(x)[..., :need]).
    Zero rows/cols contribute nothing to the matmul.
    """
    need = outputlength // 2 + 1
    eye = np.eye(l_in, dtype=np.float64)
    four = np.fft.rfft(eye, axis=-1, norm=norm)            # (l_in, l_in//2+1)
    T = np.fft.irfft(four[:, :need], axis=-1, norm=norm)   # (l_in, l_out)
    l_out = T.shape[1]
    T_pad = np.zeros((l_pad, n_pad), dtype=np.float32)
    T_pad[:l_in, :l_out] = T.astype(np.float32)
    return T_pad, l_out


def _vmem_plan():
    """Return (tile_budget_bytes, vmem_limit_bytes, capacity_bytes)."""
    try:
        info = pltpu.get_tpu_info()
        cap = int(getattr(info, "vmem_capacity_bytes", 0)) or (64 << 20)
    except Exception:
        cap = 64 << 20   # assume v7x (smallest VMEM) if the query is unavailable
    budget = min(int(cap * 0.55), 72 << 20)   # pipeline working-set target
    limit = min(int(cap * 0.80), 100 << 20)   # requested scoped-VMEM limit
    return budget, limit, cap


def _workset_bytes(tm, tk, t_rows, n_pad, sz_x, sz_t, sz_o, multi_k):
    ws = 2 * tm * tk * sz_x            # x tile (double buffered)
    ws += 2 * t_rows * n_pad * sz_t    # T buffer(s) (double buffered, conservative)
    ws += 2 * tm * n_pad * sz_o        # output tile (double buffered)
    if multi_k:
        ws += tm * n_pad * 4           # f32 accumulator scratch
    return ws


def _single_k_kernel(x_ref, t_ref, o_ref):
    o_ref[...] = jnp.dot(
        x_ref[...], t_ref[...], preferred_element_type=jnp.float32
    ).astype(o_ref.dtype)


def _make_multi_k_kernel(tk: int, t_resident: bool):
    def kernel(x_ref, t_ref, o_ref, acc_ref):
        k = pl.program_id(1)

        @pl.when(k == 0)
        def _init():
            acc_ref[...] = jnp.zeros_like(acc_ref)

        if t_resident:
            start = pl.multiple_of(k * tk, tk)
            t_blk = t_ref[pl.ds(start, tk), :]
        else:
            t_blk = t_ref[...]

        acc_ref[...] += jnp.dot(x_ref[...], t_blk,
                                preferred_element_type=jnp.float32)

        @pl.when(k == pl.num_programs(1) - 1)
        def _store():
            o_ref[...] = acc_ref[...].astype(o_ref.dtype)

    return kernel


def spectral_pooling(x, outputlength: int, norm: str = "backward",
                     trans: bool = False, _force_multi_k: bool = False):
    """JAX/Pallas equivalent of Spectralpooling.forward (pad_pos is unused there)."""
    if trans:
        x = jnp.transpose(x, (0, 2, 1))
    B, C, L = x.shape
    rows = B * C

    need = min(outputlength // 2 + 1, L // 2 + 1)
    l_out = 2 * (need - 1)
    if l_out < 1:
        raise ValueError("outputlength must be >= 2 (irfft output would be empty)")

    in_dtype = jnp.bfloat16 if x.dtype == jnp.bfloat16 else jnp.float32
    out_dtype = x.dtype if x.dtype in (jnp.float32, jnp.bfloat16) else jnp.float32
    sz_x = jnp.dtype(in_dtype).itemsize
    sz_t = sz_x
    sz_o = jnp.dtype(out_dtype).itemsize

    # Lane-dense output width; multiple of 256 once large (full MXU width).
    N_pad = _round_up(l_out, 128)
    if N_pad > 256:
        N_pad = _round_up(l_out, 256)

    budget, vmem_limit, cap = _vmem_plan()

    # ---- row-tile cap ------------------------------------------------------
    rows16 = _round_up(rows, 16)        # bf16 packs 16 sublanes (ok for f32 too)
    tm_cap = min(2048, rows16)
    if rows16 > 32:
        # keep >= 2 row tiles so both v7x TensorCores get work on "parallel"
        tm_cap = min(tm_cap, max(16, _round_up(_cdiv(rows, 2), 16)))

    # ---- K strategy ----------------------------------------------------------
    single_fits = _workset_bytes(min(tm_cap, 512), L, L, N_pad,
                                 sz_x, sz_t, sz_o, False) <= budget
    if not _force_multi_k and (L <= 1024 or single_fits):
        multi_k = False
        TK = L
        L_pad = L
    else:
        multi_k = True
        TK = 256 if _force_multi_k else 512
        L_pad = _round_up(L, TK)

    # ---- TM from the VMEM budget (tiled-T bookkeeping, conservative) --------
    TM = tm_cap
    t_rows_book = TK if multi_k else L_pad
    while TM > 16 and _workset_bytes(TM, TK, t_rows_book, N_pad,
                                     sz_x, sz_t, sz_o, multi_k) > budget:
        TM = max(16, _round_up(TM // 2, 16))
    # shrink TK for huge N_pad, never below 256 (v6e/v7x MXU width)
    while multi_k and TK > 256 and _workset_bytes(TM, TK, TK, N_pad,
                                                  sz_x, sz_t, sz_o, True) > budget:
        TK -= 256
        L_pad = _round_up(L, TK)
    if TM >= rows:
        TM = rows            # single full-extent row block (always layout-legal)

    # ---- T residency: DMA T once for the whole grid when it fits ------------
    if multi_k:
        t_resident = _workset_bytes(TM, TK, L_pad, N_pad,
                                    sz_x, sz_t, sz_o, True) <= budget
    else:
        t_resident = True

    # Host-built, cached pooling matrix (trace-time constant, zero-padded).
    T_np, l_out_chk = _spectral_pool_matrix_np(L, outputlength, norm, L_pad, N_pad)
    assert l_out_chk == l_out
    T = jnp.asarray(T_np, dtype=in_dtype)

    x2 = x.reshape(rows, L)
    if x2.dtype != in_dtype:
        x2 = x2.astype(in_dtype)
    if L_pad != L:
        # zero-pad the contraction dim only (padded T rows are zero, so garbage
        # here would be unsafe); ragged row tiles need no padding.
        x2 = jnp.pad(x2, ((0, 0), (0, L_pad - L)))

    n_row_tiles = _cdiv(rows, TM)

    if multi_k:
        grid = (n_row_tiles, L_pad // TK)
        if t_resident:
            t_spec = pl.BlockSpec((L_pad, N_pad), lambda i, k: (0, 0))
        else:
            t_spec = pl.BlockSpec((TK, N_pad), lambda i, k: (k, 0))
        in_specs = [pl.BlockSpec((TM, TK), lambda i, k: (i, k)), t_spec]
        out_specs = pl.BlockSpec((TM, N_pad), lambda i, k: (i, 0))
        scratch = [pltpu.VMEM((TM, N_pad), jnp.float32)]
        dims = ("parallel", "arbitrary")
        kernel = _make_multi_k_kernel(TK, t_resident)
    else:
        grid = (n_row_tiles,)
        in_specs = [pl.BlockSpec((TM, L_pad), lambda i: (i, 0)),
                    pl.BlockSpec((L_pad, N_pad), lambda i: (0, 0))]
        out_specs = pl.BlockSpec((TM, N_pad), lambda i: (i, 0))
        scratch = []
        dims = ("parallel",)
        kernel = _single_k_kernel

    ws_final = _workset_bytes(TM, TK, L_pad if t_resident else TK, N_pad,
                              sz_x, sz_t, sz_o, multi_k)
    vmem_limit = max(vmem_limit, min(int(cap * 0.9), ws_final + (8 << 20)))
    vmem_limit = max(int(vmem_limit), 32 << 20)

    t_reads = 1 if t_resident else n_row_tiles
    cost = pl.CostEstimate(
        flops=2 * rows * L_pad * N_pad,
        transcendentals=0,
        bytes_accessed=int(rows * L_pad * sz_x
                           + t_reads * L_pad * N_pad * sz_t
                           + rows * N_pad * sz_o),
    )

    out2 = pl.pallas_call(
        kernel,
        out_shape=jax.ShapeDtypeStruct((rows, N_pad), out_dtype),
        grid_spec=pltpu.PrefetchScalarGridSpec(
            num_scalar_prefetch=0,
            grid=grid,
            in_specs=in_specs,
            out_specs=out_specs,
            scratch_shapes=scratch,
        ),
        compiler_params=pltpu.CompilerParams(
            dimension_semantics=dims,
            vmem_limit_bytes=vmem_limit,
        ),
        cost_estimate=cost,
    )(x2, T)

    out = out2 if N_pad == l_out else out2[:, :l_out]
    out = out.reshape(B, C, l_out)
    if out.dtype != x.dtype and x.dtype in (jnp.float32, jnp.bfloat16):
        out = out.astype(x.dtype)
    if trans:
        out = jnp.transpose(out, (0, 2, 1))
    return out


if __name__ == "__main__":
    key = jax.random.PRNGKey(0)

    # ---- main case (matches the module's typical use) -----------------------
    B, C, L = 2, 4, 16
    outputlength = 8                      # even -> irfft length == outputlength
    x = jax.random.normal(key, (B, C, L), dtype=jnp.float32)

    out = jax.block_until_ready(spectral_pooling(x, outputlength, norm="backward"))

    x_np = np.asarray(x, dtype=np.float64)
    need = outputlength // 2 + 1
    ref = np.fft.irfft(np.fft.rfft(x_np, axis=-1, norm="backward")[:, :, :need],
                       axis=-1, norm="backward")
    assert out.shape == ref.shape == (B, C, 2 * (need - 1))
    np.testing.assert_allclose(np.asarray(out), ref, rtol=1e-4, atol=1e-5)

    # ---- trans=True path of the module --------------------------------------
    xt = jnp.transpose(x, (0, 2, 1))      # module permutes back internally
    out_t = jax.block_until_ready(spectral_pooling(xt, outputlength, trans=True))
    np.testing.assert_allclose(np.asarray(out_t), np.transpose(ref, (0, 2, 1)),
                               rtol=1e-4, atol=1e-5)

    # ---- exercise the K-reduction + VMEM-resident-T path --------------------
    L2, outlen2 = 512, 128
    x2 = jax.random.normal(jax.random.PRNGKey(1), (B, C, L2), dtype=jnp.float32)
    out2 = jax.block_until_ready(
        spectral_pooling(x2, outlen2, norm="backward", _force_multi_k=True))
    need2 = outlen2 // 2 + 1
    ref2 = np.fft.irfft(
        np.fft.rfft(np.asarray(x2, dtype=np.float64), axis=-1,
                    norm="backward")[:, :, :need2],
        axis=-1, norm="backward")
    np.testing.assert_allclose(np.asarray(out2), ref2, rtol=1e-3, atol=1e-4)

    print("KERNEL_OK")
</pallas_src>

<mosaic_0001>
module attributes {stable_mosaic.version = 11 : i64} {
  func.func @_single_k_kernel(%arg0: i32, %arg1: memref<8x16xf32, #tpu.memory_space<vmem>>, %arg2: memref<16x128xf32, #tpu.memory_space<vmem>>, %arg3: memref<8x128xf32, #tpu.memory_space<vmem>>) attributes {dimension_semantics = [#tpu.dimension_semantics<parallel>], iteration_bounds = array<i64: 1>, scalar_prefetch = 0 : i64, scratch_operands = 0 : i64, tpu.core_type = #tpu.core_type<tc>, window_params = [{transform_indices = @transform_0, window_bounds = array<i64: 8, 16>}, {pipeline_mode = #tpu.pipeline_mode<synchronous>, transform_indices = @transform_1, window_bounds = array<i64: 16, 128>}, {transform_indices = @transform_2, window_bounds = array<i64: 8, 128>}]} {
    %c0 = arith.constant 0 : index
    %c0_0 = arith.constant 0 : index
    %0 = vector.load %arg1[%c0, %c0_0] : memref<8x16xf32, #tpu.memory_space<vmem>>, vector<8x16xf32>
    %c0_1 = arith.constant 0 : index
    %c0_2 = arith.constant 0 : index
    %1 = vector.load %arg2[%c0_1, %c0_2] : memref<16x128xf32, #tpu.memory_space<vmem>>, vector<16x128xf32>
    %cst = arith.constant dense<0.000000e+00> : vector<8x128xf32>
    %2 = tpu.matmul %0, %1, %cst {dimension_numbers = #tpu.dot_dimension_numbers<[1], [0], [0], [1], [0, 0, 1, 1], [], []>} : vector<8x16xf32>, vector<16x128xf32>, vector<8x128xf32> -> vector<8x128xf32>
    %c0_3 = arith.constant 0 : index
    %c0_4 = arith.constant 0 : index
    %3 = vector.load %arg3[%c0_3, %c0_4] : memref<8x128xf32, #tpu.memory_space<vmem>>, vector<8x128xf32>
    tpu.vector_store %arg3[%c0_3, %c0_4], %2 {strides = array<i32>} : memref<8x128xf32, #tpu.memory_space<vmem>>, vector<8x128xf32>,
    return
  }
  func.func @transform_0(%arg0: i32) -> (i32, i32) {
    %c0_i32 = arith.constant 0 : i32
    %c0_i32_0 = arith.constant 0 : i32
    return %arg0, %c0_i32 : i32, i32
  }
  func.func @transform_1(%arg0: i32) -> (i32, i32) {
    %c0_i32 = arith.constant 0 : i32
    %c0_i32_0 = arith.constant 0 : i32
    %c0_i32_1 = arith.constant 0 : i32
    return %c0_i32, %c0_i32_0 : i32, i32
  }
  func.func @transform_2(%arg0: i32) -> (i32, i32) {
    %c0_i32 = arith.constant 0 : i32
    %c0_i32_0 = arith.constant 0 : i32
    return %arg0, %c0_i32 : i32, i32
  }
}

</mosaic_0001>

<llo_original>
// kernel: tpu_custom_call.1
$region0: #{tpu_custom_call.1}
  #allocation0 [shape = 'u32[]', space=smem, size = 0x4, offset = 0x4, fixed_abs, tag = 'smem constant byte address 0x4 - core index']
  #allocation1 [shape = 'u32[144,128]{1,0:T(1,128)}', space=vmem, size = 0x12000, scoped, tag = 'internal scratch']
  %s0 = inlined_call_operand.hbm [shape: f32[8,16], index: 0, kind: input, shape index: {}]
  %s1 = inlined_call_operand.hbm [shape: f32[16,128], index: 1, kind: input, shape index: {}]
  %s2 = inlined_call_operand.hbm [shape: f32[8,128], index: 2, kind: output, shape index: {}]
  %s3 = sld [smem:[#allocation0]]
  $region26: #{tpu_custom_call.1} parent=0
    _
  %s5 = ssub.s32 1, %s3
  %s6 = scalar_select 0, %s5, %s3
  $region1: #{tpu_custom_call.1} parent=0
    #allocation2 [shape = 'u8[4096]{0}', space=vmem, size = 0x1000, scoped, tag = 'input window, operand 0, single buffered']
    #allocation3 [shape = 's32[1]{0}', space=sflag, size = 0x4, scoped, tag = 'scoped memory for tpu_custom_call.1']
    #allocation4 [shape = 's32[1]{0}', space=sflag, size = 0x4, scoped, tag = 'scoped memory for tpu_custom_call.1']
    #allocation5 [shape = 'u8[8192]{0}', space=vmem, size = 0x2000, scoped, tag = 'input window, operand 1, single buffered']
    #allocation6 [shape = 's32[1]{0}', space=sflag, size = 0x4, scoped, tag = 'scoped memory for tpu_custom_call.1']
    #allocation7 [shape = 'u8[4096]{0}', space=vmem, size = 0x1000, scoped, tag = 'output window, operand 0, single buffered']
    %7 = vsyncpa [#allocation3], 0
    %8 = vsyncpa [#allocation6], 0
    %9 = vsyncpa [#allocation4], 0
    // Predicated region
    $region2: #{tpu_custom_call.1} parent=1 // pred_check
      _
    $region3: #{tpu_custom_call.1} parent=1 // pred_check_branch
      %11 = sbr.rel (0) target = $region5
    $region4: #{tpu_custom_call.1} parent=1 // pred_region
      %s13 = ssub.s32 128, 128
      %14 = vsyncadd [#allocation3], %s13
      %s16 = sshll.u32 [#allocation2], 4
      %s17 = int_to_ptr.vmem [resolvable:$true] %s16
      %19 = dma.hbm_to_vmem [thread:$0]  %s0, 128, %s17, [#allocation3]
    $region5: #{tpu_custom_call.1} parent=1 // pred_fallthru
      _
    // Predicated region
    $region6: #{tpu_custom_call.1} parent=1 // pred_check
      _
    $region7: #{tpu_custom_call.1} parent=1 // pred_check_branch
      %21 = sbr.rel (0) target = $region9
    $region8: #{tpu_custom_call.1} parent=1 // pred_region
      %s23 = ssub.s32 256, 256
      %24 = vsyncadd [#allocation6], %s23
      %s25 = sshll.u32 [#allocation5], 4
      %s26 = int_to_ptr.vmem [resolvable:$true] %s25
      %31 = dma.hbm_to_vmem [thread:$0]  %s1, 256, %s26, [#allocation6], 128, 128, 8
    $region9: #{tpu_custom_call.1} parent=1 // pred_fallthru
      _
    // Predicated region
    $region10: #{tpu_custom_call.1} parent=1 // pred_check
      _
    $region11: #{tpu_custom_call.1} parent=1 // pred_check_branch
      %33 = sbr.rel (0) target = $region13
    $region12: #{tpu_custom_call.1} parent=1 // pred_region
      %34 = dma.done [#allocation3], 128
    $region13: #{tpu_custom_call.1} parent=1 // pred_fallthru
      _
    // Predicated region
    $region14: #{tpu_custom_call.1} parent=1 // pred_check
      _
    $region15: #{tpu_custom_call.1} parent=1 // pred_check_branch
      %36 = sbr.rel (0) target = $region17
    $region16: #{tpu_custom_call.1} parent=1 // pred_region
      %37 = dma.done [#allocation6], 256
    $region17: #{tpu_custom_call.1} parent=1 // pred_fallthru
      _
    %v38 = vld [vmem:[#allocation2] sm:$0xff]
    %v39 = vld [vmem:[#allocation5] sm:$0xff]
    %v40 = vld [vmem:[#allocation5 + $0x8] sm:$0xff]
    %vm41 = vcmask 130048
    %v43 = vsel %vm41, %v38, 0
    %45 = vmatprep.subr.mxu0 0.0
    %46 = vmatpush1.msra.mxu0 0.0
    %47 = vmatprep.subr.mxu0 0.0
    %48 = vmatpush1.msra.mxu0 0.0
    %49 = vmatprep.subr.mxu0 0.0
    %50 = vmatpush1.msra.mxu0 0.0
    %51 = vmatprep.subr.mxu0 0.0
    %52 = vmatpush1.msra.mxu0 0.0
    %53 = vmatprep.subr.mxu0 0.0
    %54 = vmatpush1.msra.mxu0 0.0
    %55 = vmatprep.subr.mxu0 0.0
    %56 = vmatpush1.msra.mxu0 0.0
    %57 = vmatprep.subr.mxu0 0.0
    %58 = vmatpush1.msra.mxu0 0.0
    %59 = vmatprep.subr.mxu0 0.0
    %60 = vmatpush1.msra.mxu0 0.0
    %61 = vmatprep.subr.mxu0 0.0
    %62 = vmatpush1.msra.mxu0 0.0
    %63 = vmatprep.subr.mxu0 0.0
    %64 = vmatpush1.msra.mxu0 0.0
    %65 = vmatprep.subr.mxu0 0.0
    %66 = vmatpush1.msra.mxu0 0.0
    %67 = vmatprep.subr.mxu0 0.0
    %68 = vmatpush1.msra.mxu0 0.0
    %69 = vmatprep.subr.mxu0 0.0
    %70 = vmatpush1.msra.mxu0 0.0
    %71 = vmatprep.subr.mxu0 0.0
    %72 = vmatpush1.msra.mxu0 0.0
    %73 = vmatprep.subr.mxu0 0.0
    %74 = vmatpush1.msra.mxu0 %v40
    %75 = vmatprep.subr.mxu0 0.0
    %76 = vmatpush1.msra.mxu0 %v39
    %77 = vmatprep.subr.mxu0 0.0
    %78 = vmatpush2.msra.mxu0 0.0
    %79 = vmatprep.subr.mxu0 0.0
    %80 = vmatpush2.msra.mxu0 0.0
    %81 = vmatprep.subr.mxu0 0.0
    %82 = vmatpush2.msra.mxu0 0.0
    %83 = vmatprep.subr.mxu0 0.0
    %84 = vmatpush2.msra.mxu0 0.0
    %85 = vmatprep.subr.mxu0 0.0
    %86 = vmatpush2.msra.mxu0 0.0
    %87 = vmatprep.subr.mxu0 0.0
    %88 = vmatpush2.msra.mxu0 0.0
    %89 = vmatprep.subr.mxu0 0.0
    %90 = vmatpush2.msra.mxu0 0.0
    %91 = vmatprep.subr.mxu0 0.0
    %92 = vmatpush2.msra.mxu0 0.0
    %93 = vmatprep.subr.mxu0 0.0
    %94 = vmatpush2.msra.mxu0 0.0
    %95 = vmatprep.subr.mxu0 0.0
    %96 = vmatpush2.msra.mxu0 0.0
    %97 = vmatprep.subr.mxu0 0.0
    %98 = vmatpush2.msra.mxu0 0.0
    %99 = vmatprep.subr.mxu0 0.0
    %100 = vmatpush2.msra.mxu0 0.0
    %101 = vmatprep.subr.mxu0 0.0
    %102 = vmatpush2.msra.mxu0 0.0
    %103 = vmatprep.subr.mxu0 0.0
    %104 = vmatpush2.msra.mxu0 0.0
    %105 = vmatprep.subr.mxu0 0.0
    %106 = vmatpush2.msra.mxu0 0.0
    %107 = vmatprep.subr.mxu0 0.0
    %108 = vmatpush2.msra.mxu0 0.0
    %109 = vmatprep.mubr.f32.mxu0 0.0
    %110 = vmatmul.mubr.f32.gmra.mxu0 %v43
    %v111 = vpop.f32.mrf.mxu0
    %v112 = vadd.f32 0.0, %v111
    %v113 = vpop.f32.mrf.mxu0
    %114 = vdwg.mxu0
    %115 = vst [vmem:[#allocation7] sm:$0xff] %v112
    // Predicated region
    $region18: #{tpu_custom_call.1} parent=1 // pred_check
      _
    $region19: #{tpu_custom_call.1} parent=1 // pred_check_branch
      %117 = sbr.rel (0) target = $region21
    $region20: #{tpu_custom_call.1} parent=1 // pred_region
      %s119 = ssub.s32 128, 128
      %120 = vsyncadd [#allocation4], %s119
      %s122 = sshll.u32 [#allocation7], 4
      %s123 = int_to_ptr.vmem [resolvable:$true] %s122
      %125 = dma.vmem_to_hbm [thread:$0]  %s123, 128, %s2, [#allocation4]
    $region21: #{tpu_custom_call.1} parent=1 // pred_fallthru
      _
    // Predicated region
    $region22: #{tpu_custom_call.1} parent=1 // pred_check
      _
    $region23: #{tpu_custom_call.1} parent=1 // pred_check_branch
      %127 = sbr.rel (0) target = $region25
    $region24: #{tpu_custom_call.1} parent=1 // pred_region
      %128 = dma.done [#allocation4], 128
    $region25: #{tpu_custom_call.1} parent=1 // pred_fallthru
      _
    %129 = vsyncpa [#allocation3], 1
    %130 = vsyncpa [#allocation6], 1
    %131 = vsyncpa [#allocation4], 1

</llo_original>
